<compile_context>
chip_gen: v6e
topology: v6e:2x2x1
jax: 0.10.0
libtpu: 0.0.40
codegen_flags: <defaults>
</compile_context>

<pallas_src>
import jax
import jax.numpy as jnp
from jax.experimental import pallas as pl
from jax.experimental.pallas import tpu as pltpu


def message_attention_kernel(x_ref, mask_ref, w1t_ref, w2_ref, o_ref):
    """Bt batch elements per grid step.

    x_ref    : (Bt, M, H) VMEM tile, f32
    mask_ref : (Bt, M)    VMEM tile (1.0 = valid message, 0.0 = padding)
    w1t_ref  : (H, H)     = W1.T in bf16, so w1(x) == x @ w1t (MXU input)
    w2_ref   : (1, H)     = W2 row in f32
    o_ref    : (Bt, H)    output tile
    """
    Bt, M, H = x_ref.shape
    x = x_ref[...]                                          # (Bt, M, H) f32

    # ---- W1 matmul on the MXU: collapse (Bt, M) rows, bf16 inputs, f32 accum.
    xf = x.reshape(Bt * M, H)
    h = jnp.tanh(
        jnp.dot(xf.astype(jnp.bfloat16), w1t_ref[...],
                preferred_element_type=jnp.float32))        # (Bt*M, H) f32
    h = h.reshape(Bt, M, H)

    # ---- w2 projection as VPU multiply + lane reduction (no N=1 MXU matmul);
    #      logits land lane-dense as (Bt, M).
    att = jnp.sum(h * w2_ref[...], axis=-1)                 # (Bt, M)

    # ---- masked softmax over the message axis (lane axis), f32 throughout.
    mask = mask_ref[...]                                    # (Bt, M)
    logits = att - 500.0 * (1.0 - mask)
    m = jnp.max(logits, axis=-1, keepdims=True)             # (Bt, 1)
    e = jnp.exp(logits - m)                                 # (Bt, M)
    denom = jnp.sum(e, axis=-1, keepdims=True)              # (Bt, 1)
    u = e * pl.reciprocal(denom, approx=True)               # (Bt, M)

    # ---- weighted sum over messages as a batched matmul reusing the x tile.
    out = jnp.einsum("bqm,bmh->bqh", u[:, None, :], x,
                     preferred_element_type=jnp.float32)    # (Bt, 1, H)
    o_ref[...] = out[:, 0, :].astype(o_ref.dtype)


def _choose_block_batch(B, M, H):
    """Pick Bt so the MXU sees >= ~256 rows/step while the x tile stays modest."""
    rows_target = 256
    bt = max(1, pl.cdiv(rows_target, M))
    # keep the double-buffered f32 x tile under ~8 MiB (safe on v5e/v6e/v7x VMEM)
    max_bt = max(1, (8 << 20) // max(1, 2 * M * H * 4))
    bt = min(bt, max_bt)
    if bt >= B:
        return B
    # with >1 grid step, keep (Bt, M)/(Bt, H) blocks sublane-aligned (multiple of 8)
    return ((bt + 7) // 8) * 8


def message_attention(x, msg_mask, w1, w2):
    """Pallas implementation of MessageAttention.forward.

    x        : (B, M, H) float32
    msg_mask : (B, M)    float32 (1 = valid, 0 = padded)
    w1       : (H, H)    Linear(H, H, bias=False) weight (PyTorch layout)
    w2       : (1, H)    Linear(H, 1, bias=False) weight (PyTorch layout)
    returns  : (B, H) float32
    """
    B, M, H = x.shape
    x = x.astype(jnp.float32)
    mask = msg_mask.astype(jnp.float32)              # stays (B, M): lane-dense
    w1t = w1.T.astype(jnp.bfloat16)                  # bf16 MXU input, f32 accum in-kernel
    w2_row = w2.reshape(1, H).astype(jnp.float32)

    Bt = _choose_block_batch(B, M, H)
    B_pad = pl.cdiv(B, Bt) * Bt
    if B_pad != B:
        # zero-padded rows: mask==0 -> uniform softmax over zero x -> zero output,
        # sliced away below.
        x = jnp.pad(x, ((0, B_pad - B), (0, 0), (0, 0)))
        mask = jnp.pad(mask, ((0, B_pad - B), (0, 0)))

    # explicit VMEM budget: double-buffered x/mask/out tiles + (small) weights
    tile_bytes = (2 * Bt * M * H * 4 + 2 * Bt * M * 4 + 2 * Bt * H * 4
                  + 2 * H * H * 2 + 2 * H * 4)
    vmem_limit = int(min(max(4 * tile_bytes + (4 << 20), 16 << 20), 64 << 20))

    out = pl.pallas_call(
        message_attention_kernel,
        out_shape=jax.ShapeDtypeStruct((B_pad, H), jnp.float32),
        grid_spec=pltpu.PrefetchScalarGridSpec(
            num_scalar_prefetch=0,
            grid=(B_pad // Bt,),
            in_specs=[
                pl.BlockSpec((Bt, M, H), lambda g: (g, 0, 0)),
                pl.BlockSpec((Bt, M), lambda g: (g, 0)),
                pl.BlockSpec((H, H), lambda g: (0, 0)),
                pl.BlockSpec((1, H), lambda g: (0, 0)),
            ],
            out_specs=pl.BlockSpec((Bt, H), lambda g: (g, 0)),
        ),
        compiler_params=pltpu.CompilerParams(
            dimension_semantics=("parallel",),   # shards batch blocks across TCs (v7x)
            vmem_limit_bytes=vmem_limit,
        ),
    )(x, mask, w1t, w2_row)
    return out[:B]


def message_attention_ref(x, msg_mask, w1, w2, matmul_dtype=jnp.float32):
    """Pure-JAX reference mirroring the PyTorch forward (optionally bf16 W1 matmul)."""
    h = jnp.tanh(jnp.dot(x.astype(matmul_dtype), w1.T.astype(matmul_dtype),
                         preferred_element_type=jnp.float32))          # (B, M, H)
    att = jnp.squeeze(h @ w2.T.astype(jnp.float32), axis=2)            # (B, M)
    u = jax.nn.softmax(att - 500.0 * (1.0 - msg_mask), axis=1)
    return jnp.sum(x * u[..., None], axis=1)                           # (B, H)


if __name__ == "__main__":
    B, M, H = 2, 8, 32
    key = jax.random.PRNGKey(0)
    kx, kw1, kw2 = jax.random.split(key, 3)

    x = jax.random.normal(kx, (B, M, H), dtype=jnp.float32)
    # mask: first batch has 5 valid messages, second has 8
    msg_mask = jnp.stack([
        jnp.where(jnp.arange(M) < 5, 1.0, 0.0),
        jnp.ones((M,), dtype=jnp.float32),
    ]).astype(jnp.float32)

    # deterministic parameter init (Linear weights, no bias)
    w1 = jax.random.normal(kw1, (H, H), dtype=jnp.float32) * (1.0 / jnp.sqrt(H))
    w2 = jax.random.normal(kw2, (1, H), dtype=jnp.float32) * (1.0 / jnp.sqrt(H))

    # NOTE: self.dropout_ce is defined in __init__ but never used in forward,
    # so no dropout is applied here.
    out = message_attention(x, msg_mask, w1, w2)
    jax.block_until_ready(out)

    ref_f32 = message_attention_ref(x, msg_mask, w1, w2, matmul_dtype=jnp.float32)
    ref_bf16 = message_attention_ref(x, msg_mask, w1, w2, matmul_dtype=jnp.bfloat16)

    assert out.shape == (B, H)
    # kernel uses bf16 MXU inputs with f32 accumulation -> tight vs. bf16 reference,
    # small drift vs. the pure-f32 reference.
    assert jnp.allclose(out, ref_bf16, atol=1e-2, rtol=1e-2), (out, ref_bf16)
    assert jnp.allclose(out, ref_f32, atol=5e-2, rtol=5e-2), (out, ref_f32)
    print("KERNEL_OK")
</pallas_src>

<mosaic_0001>
module attributes {stable_mosaic.version = 11 : i64} {
  func.func @message_attention_kernel(%arg0: i32, %arg1: memref<2x8x32xf32, #tpu.memory_space<vmem>>, %arg2: memref<2x8xf32, #tpu.memory_space<vmem>>, %arg3: memref<32x32xbf16, #tpu.memory_space<vmem>>, %arg4: memref<1x32xf32, #tpu.memory_space<vmem>>, %arg5: memref<2x32xf32, #tpu.memory_space<vmem>>) attributes {dimension_semantics = [#tpu.dimension_semantics<parallel>], iteration_bounds = array<i64: 1>, scalar_prefetch = 0 : i64, scratch_operands = 0 : i64, tpu.core_type = #tpu.core_type<tc>, window_params = [{transform_indices = @transform_0, window_bounds = array<i64: 2, 8, 32>}, {transform_indices = @transform_1, window_bounds = array<i64: 2, 8>}, {pipeline_mode = #tpu.pipeline_mode<synchronous>, transform_indices = @transform_2, window_bounds = array<i64: 32, 32>}, {pipeline_mode = #tpu.pipeline_mode<synchronous>, transform_indices = @transform_3, window_bounds = array<i64: 1, 32>}, {transform_indices = @transform_4, window_bounds = array<i64: 2, 32>}]} {
    %c0 = arith.constant 0 : index
    %c0_0 = arith.constant 0 : index
    %c0_1 = arith.constant 0 : index
    %0 = vector.load %arg1[%c0, %c0_0, %c0_1] : memref<2x8x32xf32, #tpu.memory_space<vmem>>, vector<2x8x32xf32>
    %1 = vector.shape_cast %0 : vector<2x8x32xf32> to vector<16x32xf32>
    %2 = arith.truncf %1 : vector<16x32xf32> to vector<16x32xbf16>
    %c0_2 = arith.constant 0 : index
    %c0_3 = arith.constant 0 : index
    %3 = vector.load %arg3[%c0_2, %c0_3] : memref<32x32xbf16, #tpu.memory_space<vmem>>, vector<32x32xbf16>
    %cst = arith.constant dense<0.000000e+00> : vector<16x32xf32>
    %4 = tpu.matmul %2, %3, %cst {dimension_numbers = #tpu.dot_dimension_numbers<[1], [0], [0], [1], [0, 0, 1, 1], [], []>} : vector<16x32xbf16>, vector<32x32xbf16>, vector<16x32xf32> -> vector<16x32xf32>
    %5 = math.tanh %4 : vector<16x32xf32>
    %6 = vector.shape_cast %5 : vector<16x32xf32> to vector<2x8x32xf32>
    %c0_4 = arith.constant 0 : index
    %c0_5 = arith.constant 0 : index
    %7 = vector.load %arg4[%c0_4, %c0_5] : memref<1x32xf32, #tpu.memory_space<vmem>>, vector<1x32xf32>
    %8 = vector.shape_cast %7 : vector<1x32xf32> to vector<1x1x32xf32>
    %9 = vector.broadcast %8 : vector<1x1x32xf32> to vector<2x8x32xf32>
    %10 = arith.mulf %6, %9 : vector<2x8x32xf32>
    %cst_6 = arith.constant dense<0.000000e+00> : vector<2x8xf32>
    %11 = vector.multi_reduction <add>, %10, %cst_6 [2] : vector<2x8x32xf32> to vector<2x8xf32>
    %c0_7 = arith.constant 0 : index
    %c0_8 = arith.constant 0 : index
    %12 = vector.load %arg2[%c0_7, %c0_8] : memref<2x8xf32, #tpu.memory_space<vmem>>, vector<2x8xf32>
    %cst_9 = arith.constant 1.000000e+00 : f32
    %13 = vector.broadcast %cst_9 : f32 to vector<2x8xf32>
    %14 = arith.subf %13, %12 : vector<2x8xf32>
    %cst_10 = arith.constant 5.000000e+02 : f32
    %15 = vector.broadcast %cst_10 : f32 to vector<2x8xf32>
    %16 = arith.mulf %15, %14 : vector<2x8xf32>
    %17 = arith.subf %11, %16 : vector<2x8xf32>
    %cst_11 = arith.constant dense<0xFF800000> : vector<2xf32>
    %18 = vector.multi_reduction <maximumf>, %17, %cst_11 [1] : vector<2x8xf32> to vector<2xf32>
    %19 = vector.shape_cast %18 : vector<2xf32> to vector<2x1xf32>
    %20 = vector.broadcast %19 : vector<2x1xf32> to vector<2x8xf32>
    %21 = arith.subf %17, %20 : vector<2x8xf32>
    %22 = math.exp %21 : vector<2x8xf32>
    %cst_12 = arith.constant dense<0.000000e+00> : vector<2xf32>
    %23 = vector.multi_reduction <add>, %22, %cst_12 [1] : vector<2x8xf32> to vector<2xf32>
    %24 = vector.shape_cast %23 : vector<2xf32> to vector<2x1xf32>
    %25 = tpu.reciprocal %24 {approx = true} : vector<2x1xf32> -> vector<2x1xf32>
    %26 = vector.broadcast %25 : vector<2x1xf32> to vector<2x8xf32>
    %27 = arith.mulf %22, %26 : vector<2x8xf32>
    %28 = vector.shape_cast %27 : vector<2x8xf32> to vector<2x1x8xf32>
    "tpu.trace_start"() <{level = 10 : i32, message = "bqm,bmh->bqh"}> : () -> ()
    %cst_13 = arith.constant dense<0.000000e+00> : vector<2x1x32xf32>
    %29 = tpu.matmul %28, %0, %cst_13 {dimension_numbers = #tpu.dot_dimension_numbers<[2], [1], [1], [2], [0, 0, 0, 1, 1, 2], [0], [0]>} : vector<2x1x8xf32>, vector<2x8x32xf32>, vector<2x1x32xf32> -> vector<2x1x32xf32>
    "tpu.trace_stop"() : () -> ()
    %30 = vector.shape_cast %29 : vector<2x1x32xf32> to vector<2x32xf32>
    %c0_14 = arith.constant 0 : index
    %c0_15 = arith.constant 0 : index
    %31 = vector.load %arg5[%c0_14, %c0_15] : memref<2x32xf32, #tpu.memory_space<vmem>>, vector<2x32xf32>
    tpu.vector_store %arg5[%c0_14, %c0_15], %30 {strides = array<i32>} : memref<2x32xf32, #tpu.memory_space<vmem>>, vector<2x32xf32>,
    return
  }
  func.func @transform_0(%arg0: i32) -> (i32, i32, i32) {
    %c0_i32 = arith.constant 0 : i32
    %c0_i32_0 = arith.constant 0 : i32
    %c0_i32_1 = arith.constant 0 : i32
    return %arg0, %c0_i32, %c0_i32_0 : i32, i32, i32
  }
  func.func @transform_1(%arg0: i32) -> (i32, i32) {
    %c0_i32 = arith.constant 0 : i32
    %c0_i32_0 = arith.constant 0 : i32
    return %arg0, %c0_i32 : i32, i32
  }
  func.func @transform_2(%arg0: i32) -> (i32, i32) {
    %c0_i32 = arith.constant 0 : i32
    %c0_i32_0 = arith.constant 0 : i32
    %c0_i32_1 = arith.constant 0 : i32
    return %c0_i32, %c0_i32_0 : i32, i32
  }
  func.func @transform_3(%arg0: i32) -> (i32, i32) {
    %c0_i32 = arith.constant 0 : i32
    %c0_i32_0 = arith.constant 0 : i32
    %c0_i32_1 = arith.constant 0 : i32
    return %c0_i32, %c0_i32_0 : i32, i32
  }
  func.func @transform_4(%arg0: i32) -> (i32, i32) {
    %c0_i32 = arith.constant 0 : i32
    %c0_i32_0 = arith.constant 0 : i32
    return %arg0, %c0_i32 : i32, i32
  }
}

</mosaic_0001>

<llo_original>
// kernel: tpu_custom_call.1
$region0: #{tpu_custom_call.1}
  #allocation0 [shape = 'u32[]', space=smem, size = 0x4, offset = 0x4, fixed_abs, tag = 'smem constant byte address 0x4 - core index']
  #allocation1 [shape = 'u32[144,128]{1,0:T(1,128)}', space=vmem, size = 0x12000, scoped, tag = 'internal scratch']
  %s0 = inlined_call_operand.hbm [shape: f32[2,8,32], index: 0, kind: input, shape index: {}]
  %s1 = inlined_call_operand.hbm [shape: f32[2,8], index: 1, kind: input, shape index: {}]
  %s2 = inlined_call_operand.hbm [shape: bf16[32,32], index: 2, kind: input, shape index: {}]
  %s3 = inlined_call_operand.vmem [shape: f32[1,32], index: 3, kind: input, shape index: {}]
  %s4 = inlined_call_operand.hbm [shape: f32[2,32], index: 4, kind: output, shape index: {}]
  %s5 = sld [smem:[#allocation0]]
  $region38: #{tpu_custom_call.1} parent=0
    _
  %s7 = ssub.s32 1, %s5
  %s8 = scalar_select 0, %s7, %s5
  $region1: #{tpu_custom_call.1} parent=0
    #allocation2 [shape = 'u8[8192]{0}', space=vmem, size = 0x2000, scoped, tag = 'input window, operand 0, single buffered']
    #allocation3 [shape = 's32[1]{0}', space=sflag, size = 0x4, scoped, tag = 'scoped memory for tpu_custom_call.1']
    #allocation4 [shape = 's32[1]{0}', space=sflag, size = 0x4, scoped, tag = 'scoped memory for tpu_custom_call.1']
    #allocation5 [shape = 'u8[1024]{0}', space=vmem, size = 0x400, scoped, tag = 'input window, operand 1, single buffered']
    #allocation6 [shape = 's32[1]{0}', space=sflag, size = 0x4, scoped, tag = 'scoped memory for tpu_custom_call.1']
    #allocation7 [shape = 'u8[8192]{0}', space=vmem, size = 0x2000, scoped, tag = 'input window, operand 2, single buffered']
    #allocation8 [shape = 'u8[1024]{0}', space=vmem, size = 0x400, scoped, tag = 'output window, operand 0, single buffered']
    %9 = vsyncpa [#allocation3], 0
    %10 = vsyncpa [#allocation6], 0
    %11 = vsyncpa [#allocation4], 0
    // Predicated region
    $region2: #{tpu_custom_call.1} parent=1 // pred_check
      _
    $region3: #{tpu_custom_call.1} parent=1 // pred_check_branch
      %13 = sbr.rel (0) target = $region5
    $region4: #{tpu_custom_call.1} parent=1 // pred_region
      %s15 = ssub.s32 256, 256
      %16 = vsyncadd [#allocation3], %s15
      %s17 = sshll.u32 [#allocation2], 4
      %s18 = int_to_ptr.vmem [resolvable:$true] %s17
      %23 = dma.hbm_to_vmem [thread:$0]  %s0, 256, %s18, [#allocation3], 128, 128, 8
    $region5: #{tpu_custom_call.1} parent=1 // pred_fallthru
      _
    // Predicated region
    $region6: #{tpu_custom_call.1} parent=1 // pred_check
      _
    $region7: #{tpu_custom_call.1} parent=1 // pred_check_branch
      %25 = sbr.rel (0) target = $region9
    $region8: #{tpu_custom_call.1} parent=1 // pred_region
      %s27 = ssub.s32 32, 32
      %28 = vsyncadd [#allocation6], %s27
      %s30 = sshll.u32 [#allocation5], 4
      %s31 = int_to_ptr.vmem [resolvable:$true] %s30
      %33 = dma.hbm_to_vmem [thread:$0]  %s1, 32, %s31, [#allocation6]
    $region9: #{tpu_custom_call.1} parent=1 // pred_fallthru
      _
    // Predicated region
    $region10: #{tpu_custom_call.1} parent=1 // pred_check
      _
    $region11: #{tpu_custom_call.1} parent=1 // pred_check_branch
      %35 = sbr.rel (0) target = $region13
    $region12: #{tpu_custom_call.1} parent=1 // pred_region
      %s37 = ssub.s32 256, 256
      %38 = vsyncadd [#allocation6], %s37
      %s39 = sshll.u32 [#allocation7], 4
      %s40 = int_to_ptr.vmem [resolvable:$true] %s39
      %45 = dma.hbm_to_vmem [thread:$0]  %s2, 256, %s40, [#allocation6], 64, 64, 4
    $region13: #{tpu_custom_call.1} parent=1 // pred_fallthru
      _
    // Predicated region
    $region14: #{tpu_custom_call.1} parent=1 // pred_check
      _
    $region15: #{tpu_custom_call.1} parent=1 // pred_check_branch
      %47 = sbr.rel (0) target = $region17
    $region16: #{tpu_custom_call.1} parent=1 // pred_region
      _
    $region17: #{tpu_custom_call.1} parent=1 // pred_fallthru
      _
    // Predicated region
    $region18: #{tpu_custom_call.1} parent=1 // pred_check
      _
    $region19: #{tpu_custom_call.1} parent=1 // pred_check_branch
      %49 = sbr.rel (0) target = $region21
    $region20: #{tpu_custom_call.1} parent=1 // pred_region
      %50 = dma.done [#allocation3], 256
    $region21: #{tpu_custom_call.1} parent=1 // pred_fallthru
      _
    // Predicated region
    $region22: #{tpu_custom_call.1} parent=1 // pred_check
      _
    $region23: #{tpu_custom_call.1} parent=1 // pred_check_branch
      %52 = sbr.rel (0) target = $region25
    $region24: #{tpu_custom_call.1} parent=1 // pred_region
      %53 = dma.done [#allocation6], 32
    $region25: #{tpu_custom_call.1} parent=1 // pred_fallthru
      _
    // Predicated region
    $region26: #{tpu_custom_call.1} parent=1 // pred_check
      _
    $region27: #{tpu_custom_call.1} parent=1 // pred_check_branch
      %55 = sbr.rel (0) target = $region29
    $region28: #{tpu_custom_call.1} parent=1 // pred_region
      %56 = dma.done [#allocation6], 256
    $region29: #{tpu_custom_call.1} parent=1 // pred_fallthru
      _
    %v58 = vld [vmem:[#allocation2] sm:$0xff]
    %v59 = vld [vmem:[#allocation2 + $0x8] sm:$0xff]
    %v60 = vpack.c.bf16 %v59, %v58
    %v61 = vld [vmem:[#allocation7] sm:$0xf]
    %v62 = vld [vmem:[#allocation7 + $0x4] sm:$0xf]
    %v63 = vld [vmem:[#allocation7 + $0x8] sm:$0xf]
    %v64 = vld [vmem:[#allocation7 + $0xc] sm:$0xf]
    %v69 = vunpack.c.l.b16 %v61
    %v70 = vunpack.c.l.b16 %v62
    %v71 = vunpack.c.l.b16 %v63
    %v72 = vunpack.c.l.b16 %v64
    %v73 = vpack.c.b16 %v70, %v69
    %v74 = vpack.c.b16 %v72, %v71
    %vm77 = vcmask 261120
    %v79 = vsel %vm77, %v60, 0
    %81 = vmatprep.subr.bf16.mxu0 0
    %82 = vmatpush1.bf16.msra.mxu0 0
    %83 = vmatprep.subr.bf16.mxu0 0
    %84 = vmatpush1.bf16.msra.mxu0 0
    %85 = vmatprep.subr.bf16.mxu0 0
    %86 = vmatpush1.bf16.msra.mxu0 0
    %87 = vmatprep.subr.bf16.mxu0 0
    %88 = vmatpush1.bf16.msra.mxu0 0
    %89 = vmatprep.subr.bf16.mxu0 0
    %90 = vmatpush1.bf16.msra.mxu0 0
    %91 = vmatprep.subr.bf16.mxu0 0
    %92 = vmatpush1.bf16.msra.mxu0 0
    %93 = vmatprep.subr.bf16.mxu0 0
    %94 = vmatpush1.bf16.msra.mxu0 %v74
    %95 = vmatprep.subr.bf16.mxu0 0
    %96 = vmatpush1.bf16.msra.mxu0 %v73
    %97 = vmatprep.subr.bf16.mxu0 0
    %98 = vmatpush2.bf16.msra.mxu0 0
    %99 = vmatprep.subr.bf16.mxu0 0
    %100 = vmatpush2.bf16.msra.mxu0 0
    %101 = vmatprep.subr.bf16.mxu0 0
    %102 = vmatpush2.bf16.msra.mxu0 0
    %103 = vmatprep.subr.bf16.mxu0 0
    %104 = vmatpush2.bf16.msra.mxu0 0
    %105 = vmatprep.subr.bf16.mxu0 0
    %106 = vmatpush2.bf16.msra.mxu0 0
    %107 = vmatprep.subr.bf16.mxu0 0
    %108 = vmatpush2.bf16.msra.mxu0 0
    %109 = vmatprep.subr.bf16.mxu0 0
    %110 = vmatpush2.bf16.msra.mxu0 0
    %111 = vmatprep.subr.bf16.mxu0 0
    %112 = vmatpush2.bf16.msra.mxu0 0
    %113 = vmatprep.mubr.bf16.mxu0 0
    %114 = vmatmul.mubr.bf16.gmra.mxu0 %v79
    %v115 = vpop.f32.mrf.mxu0
    %v116 = vadd.f32 0.0, %v115
    %v117 = vpop.f32.mrf.mxu0
    %v118 = vpop.f32.mrf.mxu0
    %v119 = vadd.f32 0.0, %v118
    %v120 = vpop.f32.mrf.mxu0
    %121 = vdwg.mxu0
    %v122 = vtanh.pop %v116
    %v123 = vtanh.pop %v119
    %v124 = vld [vmem:[%s3] sm:$0x1]
    %v126 = vlaneseq
    %v127 = vshrl.u32 %v126, 7
    %v128 = vsub.s32 0, %v127
    %v129 = vrot.slane %v124, %v128
    %v131 = vmul.f32 %v122, %v129
    %v132 = vmul.f32 %v123, %v129
    %v133 = vsel %vm77, %v131, 0.0
    %134 = vadd.xlane.f32.xlu0 %v133
    %v135 = vpop.xlane.xlu0 %134
    %v136 = vsel %vm77, %v132, 0.0
    %137 = vadd.xlane.f32.xlu0 %v136
    %v138 = vpop.xlane.xlu0 %137
    %v139 = vld [vmem:[#allocation5] sm:$0x3]
    %v140 = vsub.f32 1.0, %v139
    %v141 = vmul.f32 %v140, 500.0
    %v143 = vlaneseq
    %v144 = vshrl.u32 %v143, 7
    %v145 = vsub.s32 0, %v144
    %v146 = vrot.slane %v141, %v145
    %148 = vbcast.lane.b32.xlu0 %v146, 256
    %v149 = vpop.permute.xlu0 %148
    %v150 = vlaneseq
    %v151 = vshrl.u32 %v150, 7
    %v152 = vsub.s32 1, %v151
    %v153 = vrot.slane %v141, %v152
    %155 = vbcast.lane.b32.xlu0 %v153, 256
    %v156 = vpop.permute.xlu0 %155
    %v159 = vsub.f32 %v135, %v149
    %v160 = vsub.f32 %v138, %v156
    %163 = vset.pattern.permute.xlu0 0
    %164 = vperm.xlu0 %163, %v159
    %v165 = vpop.permute.xlu0 %164
    %166 = vset.pattern.permute.xlu0 0
    %167 = vperm.xlu0 %166, %v160
    %v168 = vpop.permute.xlu0 %167
    %v169 = vlaneseq
    %v170 = vand.u32 %v169, 127
    %v171 = vlaneseq
    %v172 = vshrl.u32 %v171, 7
    %v173 = vsub.s32 %v170, %v172
    %v174 = vrot.slane %v165, %v173
    %v175 = vlaneseq
    %v176 = vshrl.u32 %v175, 7
    %v177 = vsub.s32 %v170, %v176
    %v178 = vrot.slane %v168, %v177
    %vm179 = vcmask 1041409
    %v180 = vsel %vm179, %v178, %v174
    %vm182 = vcmask 58368
    %v183 = vsel %vm182, %v180, -inf
    %184 = vmax.xlane.f32.xlu0 %v183
    %v185 = vpop.xlane.xlu0 %184
    %v187 = vlaneseq
    %v188 = vshrl.u32 %v187, 7
    %v189 = vsub.s32 0, %v188
    %v190 = vrot.slane %v185, %v189
    %v191 = vlaneseq
    %v192 = vshrl.u32 %v191, 7
    %v193 = vsub.s32 1, %v192
    %v194 = vrot.slane %v185, %v193
    %v197 = vsub.f32 %v159, %v190
    %v198 = vsub.f32 %v160, %v194
    %v199 = vmul.f32 %v197, 1.442695
    %v200 = vpow.pop %v199
    %v201 = vmul.f32 %v198, 1.442695
    %v202 = vpow.pop %v201
    %205 = vset.pattern.permute.xlu0 0
    %206 = vperm.xlu0 %205, %v200
    %v207 = vpop.permute.xlu0 %206
    %208 = vset.pattern.permute.xlu0 0
    %209 = vperm.xlu0 %208, %v202
    %v210 = vpop.permute.xlu0 %209
    %v211 = vlaneseq
    %v212 = vshrl.u32 %v211, 7
    %v213 = vsub.s32 %v170, %v212
    %v214 = vrot.slane %v207, %v213
    %v215 = vlaneseq
    %v216 = vshrl.u32 %v215, 7
    %v217 = vsub.s32 %v170, %v216
    %v218 = vrot.slane %v210, %v217
    %v219 = vsel %vm179, %v218, %v214
    %v221 = vsel %vm182, %v219, 0.0
    %222 = vadd.xlane.f32.xlu0 %v221
    %v223 = vpop.xlane.xlu0 %222
    %v224 = vrcp.pop %v223
    %v226 = vlaneseq
    %v227 = vshrl.u32 %v226, 7
    %v228 = vsub.s32 0, %v227
    %v229 = vrot.slane %v224, %v228
    %v230 = vlaneseq
    %v231 = vshrl.u32 %v230, 7
    %v232 = vsub.s32 1, %v231
    %v233 = vrot.slane %v224, %v232
    %v236 = vmul.f32 %v200, %v229
    %v237 = vmul.f32 %v202, %v233
    %239 = vset.pattern.permute.xlu0 0
    %240 = vperm.xlu0 %239, %v236
    %v241 = vpop.permute.xlu0 %240
    %v242 = vlaneseq
    %v243 = vshrl.u32 %v242, 7
    %v244 = vsub.s32 %v170, %v243
    %v245 = vrot.slane %v241, %v244
    %vm246 = vcmask 64512
    %v247 = vsel %vm246, %v245, 0
    %249 = vmatprep.subr.mxu0 0.0
    %250 = vmatpush1.msra.mxu0 0.0
    %251 = vmatprep.subr.mxu0 0.0
    %252 = vmatpush1.msra.mxu0 0.0
    %253 = vmatprep.subr.mxu0 0.0
    %254 = vmatpush1.msra.mxu0 0.0
    %255 = vmatprep.subr.mxu0 0.0
    %256 = vmatpush1.msra.mxu0 0.0
    %257 = vmatprep.subr.mxu0 0.0
    %258 = vmatpush1.msra.mxu0 0.0
    %259 = vmatprep.subr.mxu0 0.0
    %260 = vmatpush1.msra.mxu0 0.0
    %261 = vmatprep.subr.mxu0 0.0
    %262 = vmatpush1.msra.mxu0 0.0
    %263 = vmatprep.subr.mxu0 0.0
    %264 = vmatpush1.msra.mxu0 0.0
    %265 = vmatprep.subr.mxu0 0.0
    %266 = vmatpush1.msra.mxu0 0.0
    %267 = vmatprep.subr.mxu0 0.0
    %268 = vmatpush1.msra.mxu0 0.0
    %269 = vmatprep.subr.mxu0 0.0
    %270 = vmatpush1.msra.mxu0 0.0
    %271 = vmatprep.subr.mxu0 0.0
    %272 = vmatpush1.msra.mxu0 0.0
    %273 = vmatprep.subr.mxu0 0.0
    %274 = vmatpush1.msra.mxu0 0.0
    %275 = vmatprep.subr.mxu0 0.0
    %276 = vmatpush1.msra.mxu0 0.0
    %277 = vmatprep.subr.mxu0 0.0
    %278 = vmatpush1.msra.mxu0 0.0
    %279 = vmatprep.subr.mxu0 0.0
    %280 = vmatpush1.msra.mxu0 %v58
    %281 = vmatprep.subr.mxu0 0.0
    %282 = vmatpush2.msra.mxu0 0.0
    %283 = vmatprep.subr.mxu0 0.0
    %284 = vmatpush2.msra.mxu0 0.0
    %285 = vmatprep.subr.mxu0 0.0
    %286 = vmatpush2.msra.mxu0 0.0
    %287 = vmatprep.subr.mxu0 0.0
    %288 = vmatpush2.msra.mxu0 0.0
    %289 = vmatprep.subr.mxu0 0.0
    %290 = vmatpush2.msra.mxu0 0.0
    %291 = vmatprep.subr.mxu0 0.0
    %292 = vmatpush2.msra.mxu0 0.0
    %293 = vmatprep.subr.mxu0 0.0
    %294 = vmatpush2.msra.mxu0 0.0
    %295 = vmatprep.subr.mxu0 0.0
    %296 = vmatpush2.msra.mxu0 0.0
    %297 = vmatprep.subr.mxu0 0.0
    %298 = vmatpush2.msra.mxu0 0.0
    %299 = vmatprep.subr.mxu0 0.0
    %300 = vmatpush2.msra.mxu0 0.0
    %301 = vmatprep.subr.mxu0 0.0
    %302 = vmatpush2.msra.mxu0 0.0
    %303 = vmatprep.subr.mxu0 0.0
    %304 = vmatpush2.msra.mxu0 0.0
    %305 = vmatprep.subr.mxu0 0.0
    %306 = vmatpush2.msra.mxu0 0.0
    %307 = vmatprep.subr.mxu0 0.0
    %308 = vmatpush2.msra.mxu0 0.0
    %309 = vmatprep.subr.mxu0 0.0
    %310 = vmatpush2.msra.mxu0 0.0
    %311 = vmatprep.subr.mxu0 0.0
    %312 = vmatpush2.msra.mxu0 0.0
    %313 = vmatprep.mubr.f32.mxu0 0.0
    %314 = vmatmul.mubr.f32.gmra.mxu0 %v247
    %v315 = vpop.f32.mrf.mxu0
    %v316 = vadd.f32 0.0, %v315
    %v317 = vpop.f32.mrf.mxu0
    %318 = vdwg.mxu0
    %320 = vset.pattern.permute.xlu0 0
    %321 = vperm.xlu0 %320, %v237
    %v322 = vpop.permute.xlu0 %321
    %v323 = vlaneseq
    %v324 = vshrl.u32 %v323, 7
    %v325 = vsub.s32 %v170, %v324
    %v326 = vrot.slane %v322, %v325
    %v327 = vsel %vm246, %v326, 0
    %329 = vmatprep.subr.mxu0 0.0
    %330 = vmatpush1.msra.mxu0 0.0
    %331 = vmatprep.subr.mxu0 0.0
    %332 = vmatpush1.msra.mxu0 0.0
    %333 = vmatprep.subr.mxu0 0.0
    %334 = vmatpush1.msra.mxu0 0.0
    %335 = vmatprep.subr.mxu0 0.0
    %336 = vmatpush1.msra.mxu0 0.0
    %337 = vmatprep.subr.mxu0 0.0
    %338 = vmatpush1.msra.mxu0 0.0
    %339 = vmatprep.subr.mxu0 0.0
    %340 = vmatpush1.msra.mxu0 0.0
    %341 = vmatprep.subr.mxu0 0.0
    %342 = vmatpush1.msra.mxu0 0.0
    %343 = vmatprep.subr.mxu0 0.0
    %344 = vmatpush1.msra.mxu0 0.0
    %345 = vmatprep.subr.mxu0 0.0
    %346 = vmatpush1.msra.mxu0 0.0
    %347 = vmatprep.subr.mxu0 0.0
    %348 = vmatpush1.msra.mxu0 0.0
    %349 = vmatprep.subr.mxu0 0.0
    %350 = vmatpush1.msra.mxu0 0.0
    %351 = vmatprep.subr.mxu0 0.0
    %352 = vmatpush1.msra.mxu0 0.0
    %353 = vmatprep.subr.mxu0 0.0
    %354 = vmatpush1.msra.mxu0 0.0
    %355 = vmatprep.subr.mxu0 0.0
    %356 = vmatpush1.msra.mxu0 0.0
    %357 = vmatprep.subr.mxu0 0.0
    %358 = vmatpush1.msra.mxu0 0.0
    %359 = vmatprep.subr.mxu0 0.0
    %360 = vmatpush1.msra.mxu0 %v59
    %361 = vmatprep.subr.mxu0 0.0
    %362 = vmatpush2.msra.mxu0 0.0
    %363 = vmatprep.subr.mxu0 0.0
    %364 = vmatpush2.msra.mxu0 0.0
    %365 = vmatprep.subr.mxu0 0.0
    %366 = vmatpush2.msra.mxu0 0.0
    %367 = vmatprep.subr.mxu0 0.0
    %368 = vmatpush2.msra.mxu0 0.0
    %369 = vmatprep.subr.mxu0 0.0
    %370 = vmatpush2.msra.mxu0 0.0
    %371 = vmatprep.subr.mxu0 0.0
    %372 = vmatpush2.msra.mxu0 0.0
    %373 = vmatprep.subr.mxu0 0.0
    %374 = vmatpush2.msra.mxu0 0.0
    %375 = vmatprep.subr.mxu0 0.0
    %376 = vmatpush2.msra.mxu0 0.0
    %377 = vmatprep.subr.mxu0 0.0
    %378 = vmatpush2.msra.mxu0 0.0
    %379 = vmatprep.subr.mxu0 0.0
    %380 = vmatpush2.msra.mxu0 0.0
    %381 = vmatprep.subr.mxu0 0.0
    %382 = vmatpush2.msra.mxu0 0.0
    %383 = vmatprep.subr.mxu0 0.0
    %384 = vmatpush2.msra.mxu0 0.0
    %385 = vmatprep.subr.mxu0 0.0
    %386 = vmatpush2.msra.mxu0 0.0
    %387 = vmatprep.subr.mxu0 0.0
    %388 = vmatpush2.msra.mxu0 0.0
    %389 = vmatprep.subr.mxu0 0.0
    %390 = vmatpush2.msra.mxu0 0.0
    %391 = vmatprep.subr.mxu0 0.0
    %392 = vmatpush2.msra.mxu0 0.0
    %393 = vmatprep.mubr.f32.mxu0 0.0
    %394 = vmatmul.mubr.f32.gmra.mxu0 %v327
    %v395 = vpop.f32.mrf.mxu0
    %v396 = vadd.f32 0.0, %v395
    %v397 = vpop.f32.mrf.mxu0
    %398 = vdwg.mxu0
    %v401 = vrot.slane %v396, 7
    %v402 = vsel %vm179, %v401, %v316
    %vm404 = vcmask 254976
    %405 = vst.msk [vmem:[#allocation8] sm:$0x3] %vm404, %v402
    // Predicated region
    $region30: #{tpu_custom_call.1} parent=1 // pred_check
      _
    $region31: #{tpu_custom_call.1} parent=1 // pred_check_branch
      %407 = sbr.rel (0) target = $region33
    $region32: #{tpu_custom_call.1} parent=1 // pred_region
      %s409 = ssub.s32 32, 32
      %410 = vsyncadd [#allocation4], %s409
      %s412 = sshll.u32 [#allocation8], 4
      %s413 = int_to_ptr.vmem [resolvable:$true] %s412
      %415 = dma.vmem_to_hbm [thread:$0]  %s413, 32, %s4, [#allocation4]
    $region33: #{tpu_custom_call.1} parent=1 // pred_fallthru
      _
    // Predicated region
    $region34: #{tpu_custom_call.1} parent=1 // pred_check
      _
    $region35: #{tpu_custom_call.1} parent=1 // pred_check_branch
      %417 = sbr.rel (0) target = $region37
    $region36: #{tpu_custom_call.1} parent=1 // pred_region
      %418 = dma.done [#allocation4], 32
    $region37: #{tpu_custom_call.1} parent=1 // pred_fallthru
      _
    %419 = vsyncpa [#allocation3], 1
    %420 = vsyncpa [#allocation6], 1
    %421 = vsyncpa [#allocation4], 1

</llo_original>
